<compile_context>
chip_gen: v7x
topology: tpu7x:2x2x1
jax: 0.10.0
libtpu: 0.0.40
codegen_flags: <defaults>
</compile_context>

<pallas_src>
import functools
import math

import jax
import jax.numpy as jnp
from jax.experimental import pallas as pl
from jax.experimental.pallas import tpu as pltpu

_SUBLANE = 8
_LANE_CANDIDATES = (4096, 2048, 1024, 512, 256, 128)
_BLOCK_BYTES = 8 * 1024 * 1024        # ~8 MiB per live buffer
_VMEM_LIMIT_BYTES = 48 * 1024 * 1024  # 4 live buffers = 32 MiB; 48 MiB scoped
                                      # limit leaves headroom, < v7x 64 MiB phys
_MEGACORE_MIN_BYTES = 1 * 1024 * 1024 # force >=2 grid steps above this size
_LN10_INV = 1.0 / math.log(10.0)


def _round_up(a, b):
    return ((a + b - 1) // b) * b


def _log_kernel(x_ref, o_ref, *, eps):
    """o = log10(max(x, eps)), elementwise; compute in f32, store in out dtype."""
    x = x_ref[...]
    cdt = jnp.float32 if jnp.dtype(x.dtype).itemsize < 4 else x.dtype
    x = x.astype(cdt)
    x = jnp.maximum(x, jnp.asarray(eps, dtype=cdt))
    y = jnp.log(x) * jnp.asarray(_LN10_INV, dtype=cdt)   # log10 = ln * 1/ln(10)
    o_ref[...] = y.astype(o_ref.dtype)


def _compiler_params():
    return pltpu.CompilerParams(
        dimension_semantics=("parallel",),
        vmem_limit_bytes=_VMEM_LIMIT_BYTES,
    )


def _cost(n, itemsize):
    return pl.CostEstimate(
        flops=n, transcendentals=n, bytes_accessed=2 * n * itemsize
    )


def _run_2d(slab, eps, itemsize):
    rows, lane = slab.shape
    n = rows * lane
    row_block = max(_SUBLANE, _BLOCK_BYTES // (lane * itemsize))
    row_block = min(row_block, rows)
    if (pl.cdiv(rows, row_block) == 1
            and rows >= 2 * _SUBLANE
            and n * itemsize >= _MEGACORE_MIN_BYTES):
        # Mid-size single-block input: split so both v7x TensorCores get work.
        row_block = _round_up(pl.cdiv(rows, 2), _SUBLANE)
    grid = (pl.cdiv(rows, row_block),)
    kernel = functools.partial(_log_kernel, eps=float(eps))
    return pl.pallas_call(
        kernel,
        out_shape=jax.ShapeDtypeStruct((rows, lane), slab.dtype),
        grid=grid,
        in_specs=[pl.BlockSpec((row_block, lane), lambda i: (i, 0))],
        out_specs=pl.BlockSpec((row_block, lane), lambda i: (i, 0)),
        compiler_params=_compiler_params(),
        cost_estimate=_cost(n, itemsize),
    )(slab)


def _run_1d(flat, eps, itemsize):
    # Irregular element count: 1D kernel, lane-aligned block (multiple of
    # 8*128), partial final block masked by Pallas.  No pad, no slice.
    (n,) = flat.shape
    chunk = _SUBLANE * 128
    blk = max(chunk, (_BLOCK_BYTES // itemsize) // chunk * chunk)
    if n <= blk:
        blk = n  # single full-extent block (any length allowed)
    if (blk == n
            and n > 2 * chunk
            and n * itemsize >= _MEGACORE_MIN_BYTES):
        blk = _round_up(pl.cdiv(n, 2), chunk)  # give both v7x TCs work
    grid = (pl.cdiv(n, blk),)
    kernel = functools.partial(_log_kernel, eps=float(eps))
    return pl.pallas_call(
        kernel,
        out_shape=jax.ShapeDtypeStruct((n,), flat.dtype),
        grid=grid,
        in_specs=[pl.BlockSpec((blk,), lambda i: (i,))],
        out_specs=pl.BlockSpec((blk,), lambda i: (i,)),
        compiler_params=_compiler_params(),
        cost_estimate=_cost(n, itemsize),
    )(flat)


def pallas_log10_clip(x, eps=0.001):
    """log10(clip(x, min=eps)), preserving shape and dtype."""
    orig_shape = x.shape
    n = x.size
    if n == 0:
        return x
    itemsize = jnp.dtype(x.dtype).itemsize
    flat = x.reshape(-1)

    # Prefer the widest lane (>=128) that still fills >= 8 sublane rows;
    # fall back to any lane divisor; otherwise use the 1D irregular path.
    lane = None
    for cand in _LANE_CANDIDATES:
        if n % cand == 0 and (n // cand) >= _SUBLANE:
            lane = cand
            break
    if lane is None:
        for cand in _LANE_CANDIDATES:
            if n % cand == 0:
                lane = cand
                break

    if lane is not None:
        out = _run_2d(flat.reshape(n // lane, lane), eps, itemsize)
    else:
        out = _run_1d(flat, eps, itemsize)
    return out.reshape(orig_shape)


if __name__ == "__main__":
    key = jax.random.PRNGKey(0)
    # NCHW-like input: batch=2, channels=4, spatial=16x16; include values
    # below eps so the clip actually does something.
    x = jax.random.uniform(
        key, (2, 4, 16, 16), dtype=jnp.float32, minval=-1.0, maxval=4.0
    )

    eps = 0.001
    y = jax.block_until_ready(pallas_log10_clip(x, eps=eps))

    # Reference in plain JAX.
    y_ref = jnp.log10(jnp.maximum(x, eps))
    assert y.shape == x.shape and y.dtype == x.dtype
    assert jnp.allclose(y, y_ref, atol=1e-5, rtol=1e-5)

    print("KERNEL_OK")
</pallas_src>

<mosaic_0001>
module attributes {stable_mosaic.version = 11 : i64} {
  func.func @_log_kernel(%arg0: i32, %arg1: memref<8x256xf32, #tpu.memory_space<vmem>>, %arg2: memref<8x256xf32, #tpu.memory_space<vmem>>) attributes {dimension_semantics = [#tpu.dimension_semantics<parallel>], iteration_bounds = array<i64: 1>, scalar_prefetch = 0 : i64, scratch_operands = 0 : i64, tpu.core_type = #tpu.core_type<tc>, window_params = [{transform_indices = @transform_0, window_bounds = array<i64: 8, 256>}, {transform_indices = @transform_1, window_bounds = array<i64: 8, 256>}]} {
    %c0 = arith.constant 0 : index
    %c0_0 = arith.constant 0 : index
    %0 = vector.load %arg1[%c0, %c0_0] : memref<8x256xf32, #tpu.memory_space<vmem>>, vector<8x256xf32>
    %cst = arith.constant 1.000000e-03 : f32
    %1 = vector.broadcast %cst : f32 to vector<8x256xf32>
    %2 = arith.maximumf %0, %1 : vector<8x256xf32>
    %3 = math.log %2 : vector<8x256xf32>
    %cst_1 = arith.constant 0.434294492 : f32
    %4 = vector.broadcast %cst_1 : f32 to vector<8x256xf32>
    %5 = arith.mulf %3, %4 : vector<8x256xf32>
    %c0_2 = arith.constant 0 : index
    %c0_3 = arith.constant 0 : index
    %6 = vector.load %arg2[%c0_2, %c0_3] : memref<8x256xf32, #tpu.memory_space<vmem>>, vector<8x256xf32>
    tpu.vector_store %arg2[%c0_2, %c0_3], %5 {strides = array<i32>} : memref<8x256xf32, #tpu.memory_space<vmem>>, vector<8x256xf32>,
    return
  }
  func.func @transform_0(%arg0: i32) -> (i32, i32) {
    %c0_i32 = arith.constant 0 : i32
    %c0_i32_0 = arith.constant 0 : i32
    return %arg0, %c0_i32 : i32, i32
  }
  func.func @transform_1(%arg0: i32) -> (i32, i32) {
    %c0_i32 = arith.constant 0 : i32
    %c0_i32_0 = arith.constant 0 : i32
    return %arg0, %c0_i32 : i32, i32
  }
}

</mosaic_0001>

<llo_original>
// kernel: tpu_custom_call.1
$region0: #{tpu_custom_call.1}
  #allocation0 [shape = 'u32[]', space=smem, size = 0x4, offset = 0x4, fixed_abs, tag = 'smem constant byte address 0x4 - core index']
  #allocation1 [shape = 'u32[144,128]{1,0:T(1,128)}', space=vmem, size = 0x12000, scoped, tag = 'internal scratch']
  %s0 = inlined_call_operand.hbm [shape: f32[8,256], index: 0, kind: input, shape index: {}]
  %s1 = inlined_call_operand.hbm [shape: f32[8,256], index: 1, kind: output, shape index: {}]
  %s2 = sld [smem:[#allocation0]]
  $region18: #{tpu_custom_call.1} parent=0
    _
  %s4 = ssub.s32 1, %s2
  %s5 = scalar_select 0, %s4, %s2
  $region1: #{tpu_custom_call.1} parent=0
    #allocation2 [shape = 'u8[8192]{0}', space=vmem, size = 0x2000, scoped, tag = 'input window, operand 0, single buffered']
    #allocation3 [shape = 's32[1]{0}', space=sflag, size = 0x4, scoped, tag = 'scoped memory for tpu_custom_call.1']
    #allocation4 [shape = 's32[1]{0}', space=sflag, size = 0x4, scoped, tag = 'scoped memory for tpu_custom_call.1']
    #allocation5 [shape = 'u8[8192]{0}', space=vmem, size = 0x2000, scoped, tag = 'output window, operand 0, single buffered']
    %6 = vsyncpa [#allocation3], 0
    %7 = vsyncpa [#allocation4], 0
    // Predicated region
    $region2: #{tpu_custom_call.1} parent=1 // pred_check
      _
    $region3: #{tpu_custom_call.1} parent=1 // pred_check_branch
      %9 = sbr.rel (0) target = $region5
    $region4: #{tpu_custom_call.1} parent=1 // pred_region
      %s11 = ssub.s32 256, 256
      %12 = vsyncadd [#allocation3], %s11
      %s14 = sshll.u32 [#allocation2], 4
      %s15 = int_to_ptr.vmem [resolvable:$true] %s14
      %17 = dma.hbm_to_vmem [thread:$0]  %s0, 256, %s15, [#allocation3]
    $region5: #{tpu_custom_call.1} parent=1 // pred_fallthru
      _
    // Predicated region
    $region6: #{tpu_custom_call.1} parent=1 // pred_check
      _
    $region7: #{tpu_custom_call.1} parent=1 // pred_check_branch
      %19 = sbr.rel (0) target = $region9
    $region8: #{tpu_custom_call.1} parent=1 // pred_region
      %20 = dma.done [#allocation3], 256
    $region9: #{tpu_custom_call.1} parent=1 // pred_fallthru
      _
    %v21 = vld [vmem:[#allocation2] sm:$0xff]
    %v22 = vld [vmem:[#allocation2 + $0x8] sm:$0xff]
    %v23 = vmax.f32 %v21, 0.001
    %v24 = vmax.f32 %v22, 0.001
    %v25 = vlog2.pop %v23
    %v26 = vmul.f32 %v25, 0.6931472
    %v27 = vlog2.pop %v24
    %v28 = vmul.f32 %v27, 0.6931472
    %v29 = vmul.f32 %v26, 0.4342945
    %v30 = vmul.f32 %v28, 0.4342945
    %31 = vst [vmem:[#allocation5] sm:$0xff] %v29
    %32 = vst [vmem:[#allocation5 + $0x8] sm:$0xff] %v30
    // Predicated region
    $region10: #{tpu_custom_call.1} parent=1 // pred_check
      _
    $region11: #{tpu_custom_call.1} parent=1 // pred_check_branch
      %34 = sbr.rel (0) target = $region13
    $region12: #{tpu_custom_call.1} parent=1 // pred_region
      %s36 = ssub.s32 256, 256
      %37 = vsyncadd [#allocation4], %s36
      %s39 = sshll.u32 [#allocation5], 4
      %s40 = int_to_ptr.vmem [resolvable:$true] %s39
      %42 = dma.vmem_to_hbm [thread:$0]  %s40, 256, %s1, [#allocation4]
    $region13: #{tpu_custom_call.1} parent=1 // pred_fallthru
      _
    // Predicated region
    $region14: #{tpu_custom_call.1} parent=1 // pred_check
      _
    $region15: #{tpu_custom_call.1} parent=1 // pred_check_branch
      %44 = sbr.rel (0) target = $region17
    $region16: #{tpu_custom_call.1} parent=1 // pred_region
      %45 = dma.done [#allocation4], 256
    $region17: #{tpu_custom_call.1} parent=1 // pred_fallthru
      _
    %46 = vsyncpa [#allocation3], 1
    %47 = vsyncpa [#allocation4], 1

</llo_original>
